<compile_context>
chip_gen: v7x
topology: tpu7x:2x2x1
jax: 0.10.0
libtpu: 0.0.40
codegen_flags: <defaults>
</compile_context>

<pallas_src>
import jax
import jax.numpy as jnp
from jax import lax
from jax.experimental import pallas as pl
from jax.experimental.pallas import tpu as pltpu

_NEG_SLOPE = 0.2      # DGL GATConv default LeakyReLU negative slope
_NEG_BIG = -1e30


# ----------------------------- kernel ---------------------------------------
def _gat_branch_kernel(zT_ref, el_ref, erT_ref, ewT_ref, b_ref, out_ref):
    """One GATConv branch for one destination tile (all heads), transposed layout.
       zT:[HF,N] bf16  el:[N,H] f32  erT:[H,T] f32  ewT:[N,T] bf16  b:[HF,1] f32
       out:[HF,T] f32  (dst axis lane-dense everywhere)."""
    n_heads = el_ref.shape[1]
    hf = zT_ref.shape[0]
    f = hf // n_heads

    ewT = ewT_ref[...].astype(jnp.float32)        # bf16 HBM stream -> f32 once
    on_edge = ewT > 0.0                           # mask recovered in-kernel (ew>0)
    el = el_ref[...]                              # [N, H]
    erT = erT_ref[...]                            # [H, T]
    zT = zT_ref[...]                              # [HF, N] bf16

    parts = []
    for h in range(n_heads):                      # static, tiny
        s = el[:, h:h + 1] + erT[h:h + 1, :]      # [N, T] score (src x dst)
        s = jnp.where(s > 0, s, _NEG_SLOPE * s)   # leaky_relu
        s = jnp.where(on_edge, s, _NEG_BIG)       # softmax restricted to real edges
        m = jnp.max(s, axis=0, keepdims=True)     # [1, T]
        p = jnp.exp(s - m)                        # off-edge exp underflows to 0
        denom = jnp.sum(p, axis=0, keepdims=True)  # >= 1 for any column with an edge
        alpha = (p * pl.reciprocal(denom, approx=True)) * ewT   # DGL: ew post-softmax
        # transposed per-head aggregation: MXU output is [F, T], lane width = T
        part = jnp.dot(zT[h * f:(h + 1) * f, :], alpha.astype(jnp.bfloat16),
                       preferred_element_type=jnp.float32)       # [F, T]
        parts.append(part)

    out = parts[0] if n_heads == 1 else jnp.concatenate(parts, axis=0)   # [HF, T]
    out_ref[...] = out + b_ref[...]


# ----------------------------- wrapper ---------------------------------------
def _pad_rows(x, n_pad):
    return x if x.shape[0] == n_pad else jnp.pad(x, ((0, n_pad - x.shape[0]), (0, 0)))


def _pad_cols(x, n_pad):
    return x if x.shape[1] == n_pad else jnp.pad(x, ((0, 0), (0, n_pad - x.shape[1])))


def _pad_square(x, n_pad):
    n = x.shape[0]
    return x if n == n_pad else jnp.pad(x, ((0, n_pad - n), (0, n_pad - n)))


def _vmem_params():
    """(scratch budget for tile sizing, vmem_limit_bytes) tuned per chip generation."""
    cap = 64 * 1024 * 1024                        # conservative default (v7x per-TC)
    try:
        info = pltpu.get_tpu_info()
        for name in ("vmem_capacity_bytes", "vmem_bytes", "vmem_size_bytes"):
            v = getattr(info, name, None)
            if v:
                cap = int(v)
                break
    except Exception:
        pass
    limit = min(cap * 3 // 4, 100 * 1024 * 1024)  # 48 MiB on v7x, ~96 MiB on v5e/v6e
    budget = max(16 * 1024 * 1024, limit - 12 * 1024 * 1024)
    return budget, limit


def _choose_tile(n, vmem_budget):
    """Destination (lane) tile size T and padded node count.
       Accounts for the bf16 ew double-buffers AND ~4 live f32 [N,T] temporaries."""
    n8 = ((n + 7) // 8) * 8
    if n8 <= 512:
        return n8, n8                              # single tile; lane dim == full dim
    per_col = 20 * n8                              # 2*2B ew (x2 bufs) + 4*4B f32 temps
    t = (vmem_budget // per_col) // 128 * 128
    t = max(128, min(512, t))
    n_pad = ((n8 + t - 1) // t) * t
    return t, n_pad


def gat_conv_pallas(h, ewT_bf16, p, *, t, n_pad, vmem_limit):
    """One dense GATConv branch. h:[n,din], ewT_bf16:[n_pad,n_pad] (src x dst) bf16.
       Returns [n, heads*F] f32."""
    n = h.shape[0]
    heads, f = p["al"].shape
    hf = heads * f

    # Hoisted once per layer (plain XLA): projection + attention logits.
    z = jnp.dot(h.astype(jnp.float32), p["W"], precision=lax.Precision.HIGHEST)
    zh = z.reshape(n, heads, f)
    el = jnp.einsum("nhf,hf->nh", zh, p["al"], precision=lax.Precision.HIGHEST)
    er = jnp.einsum("nhf,hf->nh", zh, p["ar"], precision=lax.Precision.HIGHEST)

    zT = _pad_cols(z.T, n_pad).astype(jnp.bfloat16)        # [hf, n_pad] bf16
    el_p = _pad_rows(el, n_pad).astype(jnp.float32)        # [n_pad, heads]
    erT = _pad_cols(er.T, n_pad).astype(jnp.float32)       # [heads, n_pad]
    b_col = p["b"].reshape(hf, 1).astype(jnp.float32)      # [hf, 1]

    grid = (n_pad // t,)
    full = lambda r, c: pl.BlockSpec((r, c), lambda i: (0, 0))
    col_tiled = lambda r: pl.BlockSpec((r, t), lambda i: (0, i))

    cost = pl.CostEstimate(
        flops=int(2 * hf * n_pad * n_pad + 8 * heads * n_pad * n_pad),
        transcendentals=int(heads * n_pad * n_pad),
        bytes_accessed=int(2 * n_pad * n_pad               # ew (bf16)
                           + 2 * hf * n_pad                # zT (bf16)
                           + 4 * (2 * heads * n_pad + hf * n_pad + hf)),
    )

    outT = pl.pallas_call(
        _gat_branch_kernel,
        grid=grid,
        in_specs=[full(hf, n_pad),        # zT  (constant-index: fetched once)
                  full(n_pad, heads),     # el
                  col_tiled(heads),       # erT (dst tile)
                  col_tiled(n_pad),       # ewT (the big bf16 stream)
                  full(hf, 1)],           # bias column
        out_specs=col_tiled(hf),
        out_shape=jax.ShapeDtypeStruct((hf, n_pad), jnp.float32),
        compiler_params=pltpu.CompilerParams(
            dimension_semantics=("parallel",),      # dst tiles independent -> megacore
            vmem_limit_bytes=int(vmem_limit)),
        cost_estimate=cost,
    )(zT, el_p, erT, ewT_bf16, b_col)

    return outT[:, :n].T                             # [n, hf]


def duplex_gat_forward(params, ew_am, ew_ph, x_am, x_ph, n_layers=2):
    """Mirrors DUPLEX_gat.forward for fusion='None' (eval mode: dropout = identity)."""
    n = x_am.shape[0]
    budget, vmem_limit = _vmem_params()
    t, n_pad = _choose_tile(n, budget)

    # Edge weights: cast to bf16 ONCE per forward (shared by both layers), transposed
    # to [src, dst] so the dst axis is lane-dense inside the kernel.  On-edge weights
    # are strictly positive (>= 0.2 here) so bf16 rounding never drops an edge.
    ewT_am = _pad_square(ew_am.astype(jnp.float32).T, n_pad).astype(jnp.bfloat16)
    ewT_ph = _pad_square(ew_ph.astype(jnp.float32).T, n_pad).astype(jnp.bfloat16)

    h_am, h_ph = x_am, x_ph
    for i in range(n_layers):
        pa, pp = params["am"][i], params["ph"][i]
        out_am = gat_conv_pallas(h_am, ewT_am, pa, t=t, n_pad=n_pad,
                                 vmem_limit=vmem_limit)
        out_ph = gat_conv_pallas(h_ph, ewT_ph, pp, t=t, n_pad=n_pad,
                                 vmem_limit=vmem_limit)
        if i < n_layers - 1:
            h_am = jax.nn.relu(out_am)      # h.flatten(1) is already the output layout
            h_ph = jax.nn.relu(out_ph)
        else:
            heads, f = pa["al"].shape
            h_am = out_am.reshape(n, heads, f).mean(axis=1)   # .mean(1) over heads
            h_ph = out_ph.reshape(n, heads, f).mean(axis=1)
    return h_am, h_ph


# ---------------- pure-JAX reference (for correctness check) ----------------
def gat_conv_ref(h, W, al, ar, b, mask, ew):
    heads, f = al.shape
    n = h.shape[0]
    z = jnp.dot(h, W, precision=lax.Precision.HIGHEST).reshape(n, heads, f)
    el = jnp.einsum("nhf,hf->nh", z, al, precision=lax.Precision.HIGHEST)
    er = jnp.einsum("nhf,hf->nh", z, ar, precision=lax.Precision.HIGHEST)
    s = er[:, None, :] + el[None, :, :]                       # [dst, src, head]
    s = jnp.where(s > 0, s, _NEG_SLOPE * s)
    s = jnp.where(mask[:, :, None] > 0, s, _NEG_BIG)
    p = jnp.exp(s - s.max(axis=1, keepdims=True))
    p = jnp.where(mask[:, :, None] > 0, p, 0.0)
    alpha = p / p.sum(axis=1, keepdims=True)
    alpha = alpha * ew[:, :, None]
    out = jnp.einsum("dsh,shf->dhf", alpha, z) + b[None]
    return out.reshape(n, heads * f)


def duplex_ref(params, mask, ew_am, ew_ph, x_am, x_ph, n_layers=2):
    h_am, h_ph = x_am, x_ph
    for i in range(n_layers):
        pa, pp = params["am"][i], params["ph"][i]
        out_am = gat_conv_ref(h_am, pa["W"], pa["al"], pa["ar"], pa["b"], mask, ew_am)
        out_ph = gat_conv_ref(h_ph, pp["W"], pp["al"], pp["ar"], pp["b"], mask, ew_ph)
        if i < n_layers - 1:
            h_am, h_ph = jax.nn.relu(out_am), jax.nn.relu(out_ph)
        else:
            heads, f = pa["al"].shape
            n = out_am.shape[0]
            h_am = out_am.reshape(n, heads, f).mean(axis=1)
            h_ph = out_ph.reshape(n, heads, f).mean(axis=1)
    return h_am, h_ph


if __name__ == "__main__":
    # args: input_dim=8, hidden_dim=16, output_dim=4, head=2, nlayers=2, fusion='None'
    N, DIN, HID, HEADS, DOUT = 16, 8, 16, 2, 4
    F0 = HID // HEADS

    key = jax.random.PRNGKey(0)
    keys = jax.random.split(key, 16)

    # synthetic graph (same block for both layers): random edges + self loops
    mask = (jax.random.uniform(keys[0], (N, N)) < 0.4).astype(jnp.float32)
    mask = jnp.maximum(mask, jnp.eye(N, dtype=jnp.float32))
    # strictly positive on-edge weights (kernel recovers the mask as ew > 0)
    ew_am = mask * jax.random.uniform(keys[1], (N, N), minval=0.2, maxval=1.0)  # 'am_exist'
    ew_ph = mask * jax.random.uniform(keys[2], (N, N), minval=0.2, maxval=1.0)  # 'exist'

    x_am = jax.random.normal(keys[3], (N, DIN), dtype=jnp.float32)
    x_ph = jax.random.normal(keys[4], (N, DIN), dtype=jnp.float32)

    def gat_params(k, din, f, heads):
        k1, k2, k3 = jax.random.split(k, 3)
        return dict(
            W=0.1 * jax.random.normal(k1, (din, heads * f), jnp.float32),
            al=0.1 * jax.random.normal(k2, (heads, f), jnp.float32),
            ar=0.1 * jax.random.normal(k3, (heads, f), jnp.float32),
            b=jnp.zeros((heads, f), jnp.float32),
        )

    params = {
        "am": [gat_params(keys[5], DIN, F0, HEADS), gat_params(keys[6], HID, DOUT, HEADS)],
        "ph": [gat_params(keys[7], DIN, F0, HEADS), gat_params(keys[8], HID, DOUT, HEADS)],
    }

    h_am, h_ph = duplex_gat_forward(params, ew_am, ew_ph, x_am, x_ph)
    jax.block_until_ready((h_am, h_ph))

    r_am, r_ph = duplex_ref(params, mask, ew_am, ew_ph, x_am, x_ph)
    assert h_am.shape == (N, DOUT) and h_ph.shape == (N, DOUT)
    # tolerance covers bf16 ew / zT / MXU inputs + approx reciprocal (f32 accumulation)
    assert jnp.allclose(h_am, r_am, rtol=5e-2, atol=2e-2), float(jnp.max(jnp.abs(h_am - r_am)))
    assert jnp.allclose(h_ph, r_ph, rtol=5e-2, atol=2e-2), float(jnp.max(jnp.abs(h_ph - r_ph)))

    print("KERNEL_OK")
</pallas_src>

<mosaic_0001>
module attributes {stable_mosaic.version = 11 : i64} {
  func.func @_gat_branch_kernel(%arg0: i32, %arg1: memref<16x16xbf16, #tpu.memory_space<vmem>>, %arg2: memref<16x2xf32, #tpu.memory_space<vmem>>, %arg3: memref<2x16xf32, #tpu.memory_space<vmem>>, %arg4: memref<16x16xbf16, #tpu.memory_space<vmem>>, %arg5: memref<16x1xf32, #tpu.memory_space<vmem>>, %arg6: memref<16x16xf32, #tpu.memory_space<vmem>>) attributes {dimension_semantics = [#tpu.dimension_semantics<parallel>], iteration_bounds = array<i64: 1>, scalar_prefetch = 0 : i64, scratch_operands = 0 : i64, tpu.core_type = #tpu.core_type<tc>, window_params = [{pipeline_mode = #tpu.pipeline_mode<synchronous>, transform_indices = @transform_0, window_bounds = array<i64: 16, 16>}, {pipeline_mode = #tpu.pipeline_mode<synchronous>, transform_indices = @transform_1, window_bounds = array<i64: 16, 2>}, {transform_indices = @transform_2, window_bounds = array<i64: 2, 16>}, {transform_indices = @transform_3, window_bounds = array<i64: 16, 16>}, {pipeline_mode = #tpu.pipeline_mode<synchronous>, transform_indices = @transform_4, window_bounds = array<i64: 16, 1>}, {transform_indices = @transform_5, window_bounds = array<i64: 16, 16>}]} {
    %c0 = arith.constant 0 : index
    %c0_0 = arith.constant 0 : index
    %0 = vector.load %arg4[%c0, %c0_0] : memref<16x16xbf16, #tpu.memory_space<vmem>>, vector<16x16xbf16>
    %1 = arith.extf %0 : vector<16x16xbf16> to vector<16x16xf32>
    %cst = arith.constant 0.000000e+00 : f32
    %2 = vector.broadcast %cst : f32 to vector<16x16xf32>
    %3 = arith.cmpf ogt, %1, %2 : vector<16x16xf32>
    %c0_1 = arith.constant 0 : index
    %c0_2 = arith.constant 0 : index
    %4 = vector.load %arg2[%c0_1, %c0_2] : memref<16x2xf32, #tpu.memory_space<vmem>>, vector<16x2xf32>
    %c0_3 = arith.constant 0 : index
    %c0_4 = arith.constant 0 : index
    %5 = vector.load %arg3[%c0_3, %c0_4] : memref<2x16xf32, #tpu.memory_space<vmem>>, vector<2x16xf32>
    %c0_5 = arith.constant 0 : index
    %c0_6 = arith.constant 0 : index
    %6 = vector.load %arg1[%c0_5, %c0_6] : memref<16x16xbf16, #tpu.memory_space<vmem>>, vector<16x16xbf16>
    %7 = vector.extract_strided_slice %4 {offsets = [0, 0], sizes = [16, 1], strides = [1, 1]} : vector<16x2xf32> to vector<16x1xf32>
    %8 = vector.extract_strided_slice %5 {offsets = [0, 0], sizes = [1, 16], strides = [1, 1]} : vector<2x16xf32> to vector<1x16xf32>
    %9 = vector.broadcast %7 : vector<16x1xf32> to vector<16x16xf32>
    %10 = vector.broadcast %8 : vector<1x16xf32> to vector<16x16xf32>
    %11 = arith.addf %9, %10 : vector<16x16xf32>
    %cst_7 = arith.constant 0.000000e+00 : f32
    %12 = vector.broadcast %cst_7 : f32 to vector<16x16xf32>
    %13 = arith.cmpf ogt, %11, %12 : vector<16x16xf32>
    %cst_8 = arith.constant 2.000000e-01 : f32
    %14 = vector.broadcast %cst_8 : f32 to vector<16x16xf32>
    %15 = arith.mulf %14, %11 : vector<16x16xf32>
    %16 = arith.select %13, %11, %15 : vector<16x16xi1>, vector<16x16xf32>
    %cst_9 = arith.constant -1.000000e+30 : f32
    %17 = vector.broadcast %cst_9 : f32 to vector<16x16xf32>
    %18 = arith.select %3, %16, %17 : vector<16x16xi1>, vector<16x16xf32>
    %cst_10 = arith.constant dense<0xFF800000> : vector<16xf32>
    %19 = vector.multi_reduction <maximumf>, %18, %cst_10 [0] : vector<16x16xf32> to vector<16xf32>
    %20 = vector.shape_cast %19 : vector<16xf32> to vector<1x16xf32>
    %21 = vector.broadcast %20 : vector<1x16xf32> to vector<16x16xf32>
    %22 = arith.subf %18, %21 : vector<16x16xf32>
    %23 = math.exp %22 : vector<16x16xf32>
    %cst_11 = arith.constant dense<0.000000e+00> : vector<16xf32>
    %24 = vector.multi_reduction <add>, %23, %cst_11 [0] : vector<16x16xf32> to vector<16xf32>
    %25 = vector.shape_cast %24 : vector<16xf32> to vector<1x16xf32>
    %26 = tpu.reciprocal %25 {approx = true} : vector<1x16xf32> -> vector<1x16xf32>
    %27 = vector.broadcast %26 : vector<1x16xf32> to vector<16x16xf32>
    %28 = arith.mulf %23, %27 : vector<16x16xf32>
    %29 = arith.mulf %28, %1 : vector<16x16xf32>
    %30 = vector.extract_strided_slice %6 {offsets = [0, 0], sizes = [8, 16], strides = [1, 1]} : vector<16x16xbf16> to vector<8x16xbf16>
    %31 = arith.truncf %29 : vector<16x16xf32> to vector<16x16xbf16>
    %cst_12 = arith.constant dense<0.000000e+00> : vector<8x16xf32>
    %32 = tpu.matmul %30, %31, %cst_12 {dimension_numbers = #tpu.dot_dimension_numbers<[1], [0], [0], [1], [0, 0, 1, 1], [], []>} : vector<8x16xbf16>, vector<16x16xbf16>, vector<8x16xf32> -> vector<8x16xf32>
    %33 = vector.extract_strided_slice %4 {offsets = [0, 1], sizes = [16, 1], strides = [1, 1]} : vector<16x2xf32> to vector<16x1xf32>
    %34 = vector.extract_strided_slice %5 {offsets = [1, 0], sizes = [1, 16], strides = [1, 1]} : vector<2x16xf32> to vector<1x16xf32>
    %35 = vector.broadcast %33 : vector<16x1xf32> to vector<16x16xf32>
    %36 = vector.broadcast %34 : vector<1x16xf32> to vector<16x16xf32>
    %37 = arith.addf %35, %36 : vector<16x16xf32>
    %cst_13 = arith.constant 0.000000e+00 : f32
    %38 = vector.broadcast %cst_13 : f32 to vector<16x16xf32>
    %39 = arith.cmpf ogt, %37, %38 : vector<16x16xf32>
    %cst_14 = arith.constant 2.000000e-01 : f32
    %40 = vector.broadcast %cst_14 : f32 to vector<16x16xf32>
    %41 = arith.mulf %40, %37 : vector<16x16xf32>
    %42 = arith.select %39, %37, %41 : vector<16x16xi1>, vector<16x16xf32>
    %cst_15 = arith.constant -1.000000e+30 : f32
    %43 = vector.broadcast %cst_15 : f32 to vector<16x16xf32>
    %44 = arith.select %3, %42, %43 : vector<16x16xi1>, vector<16x16xf32>
    %cst_16 = arith.constant dense<0xFF800000> : vector<16xf32>
    %45 = vector.multi_reduction <maximumf>, %44, %cst_16 [0] : vector<16x16xf32> to vector<16xf32>
    %46 = vector.shape_cast %45 : vector<16xf32> to vector<1x16xf32>
    %47 = vector.broadcast %46 : vector<1x16xf32> to vector<16x16xf32>
    %48 = arith.subf %44, %47 : vector<16x16xf32>
    %49 = math.exp %48 : vector<16x16xf32>
    %cst_17 = arith.constant dense<0.000000e+00> : vector<16xf32>
    %50 = vector.multi_reduction <add>, %49, %cst_17 [0] : vector<16x16xf32> to vector<16xf32>
    %51 = vector.shape_cast %50 : vector<16xf32> to vector<1x16xf32>
    %52 = tpu.reciprocal %51 {approx = true} : vector<1x16xf32> -> vector<1x16xf32>
    %53 = vector.broadcast %52 : vector<1x16xf32> to vector<16x16xf32>
    %54 = arith.mulf %49, %53 : vector<16x16xf32>
    %55 = arith.mulf %54, %1 : vector<16x16xf32>
    %56 = vector.extract_strided_slice %6 {offsets = [8, 0], sizes = [8, 16], strides = [1, 1]} : vector<16x16xbf16> to vector<8x16xbf16>
    %57 = arith.truncf %55 : vector<16x16xf32> to vector<16x16xbf16>
    %cst_18 = arith.constant dense<0.000000e+00> : vector<8x16xf32>
    %58 = tpu.matmul %56, %57, %cst_18 {dimension_numbers = #tpu.dot_dimension_numbers<[1], [0], [0], [1], [0, 0, 1, 1], [], []>} : vector<8x16xbf16>, vector<16x16xbf16>, vector<8x16xf32> -> vector<8x16xf32>
    %59 = tpu.concatenate %32, %58 in 0 : vector<8x16xf32>, vector<8x16xf32> -> vector<16x16xf32>
    %c0_19 = arith.constant 0 : index
    %c0_20 = arith.constant 0 : index
    %60 = vector.load %arg5[%c0_19, %c0_20] : memref<16x1xf32, #tpu.memory_space<vmem>>, vector<16x1xf32>
    %61 = vector.broadcast %60 : vector<16x1xf32> to vector<16x16xf32>
    %62 = arith.addf %59, %61 : vector<16x16xf32>
    %c0_21 = arith.constant 0 : index
    %c0_22 = arith.constant 0 : index
    %63 = vector.load %arg6[%c0_21, %c0_22] : memref<16x16xf32, #tpu.memory_space<vmem>>, vector<16x16xf32>
    tpu.vector_store %arg6[%c0_21, %c0_22], %62 {strides = array<i32>} : memref<16x16xf32, #tpu.memory_space<vmem>>, vector<16x16xf32>,
    return
  }
  func.func @transform_0(%arg0: i32) -> (i32, i32) {
    %c0_i32 = arith.constant 0 : i32
    %c0_i32_0 = arith.constant 0 : i32
    %c0_i32_1 = arith.constant 0 : i32
    return %c0_i32, %c0_i32_0 : i32, i32
  }
  func.func @transform_1(%arg0: i32) -> (i32, i32) {
    %c0_i32 = arith.constant 0 : i32
    %c0_i32_0 = arith.constant 0 : i32
    %c0_i32_1 = arith.constant 0 : i32
    return %c0_i32, %c0_i32_0 : i32, i32
  }
  func.func @transform_2(%arg0: i32) -> (i32, i32) {
    %c0_i32 = arith.constant 0 : i32
    %c0_i32_0 = arith.constant 0 : i32
    return %c0_i32, %arg0 : i32, i32
  }
  func.func @transform_3(%arg0: i32) -> (i32, i32) {
    %c0_i32 = arith.constant 0 : i32
    %c0_i32_0 = arith.constant 0 : i32
    return %c0_i32, %arg0 : i32, i32
  }
  func.func @transform_4(%arg0: i32) -> (i32, i32) {
    %c0_i32 = arith.constant 0 : i32
    %c0_i32_0 = arith.constant 0 : i32
    %c0_i32_1 = arith.constant 0 : i32
    return %c0_i32, %c0_i32_0 : i32, i32
  }
  func.func @transform_5(%arg0: i32) -> (i32, i32) {
    %c0_i32 = arith.constant 0 : i32
    %c0_i32_0 = arith.constant 0 : i32
    return %c0_i32, %arg0 : i32, i32
  }
}

</mosaic_0001>

<llo_original>
// kernel: tpu_custom_call.1
$region0: #{tpu_custom_call.1}
  #allocation0 [shape = 'u32[]', space=smem, size = 0x4, offset = 0x4, fixed_abs, tag = 'smem constant byte address 0x4 - core index']
  #allocation1 [shape = 'u32[144,128]{1,0:T(1,128)}', space=vmem, size = 0x12000, scoped, tag = 'internal scratch']
  %s0 = inlined_call_operand.vmem [shape: bf16[16,16], index: 0, kind: input, shape index: {}]
  %s1 = inlined_call_operand.vmem [shape: f32[16,2], index: 1, kind: input, shape index: {}]
  %s2 = inlined_call_operand.vmem [shape: f32[2,16], index: 2, kind: input, shape index: {}]
  %s3 = inlined_call_operand.vmem [shape: bf16[16,16], index: 3, kind: input, shape index: {}]
  %s4 = inlined_call_operand.vmem [shape: f32[16,1], index: 4, kind: input, shape index: {}]
  %s5 = inlined_call_operand.hbm [shape: f32[16,16], index: 5, kind: output, shape index: {}]
  %s6 = sld [smem:[#allocation0]]
  $region30: #{tpu_custom_call.1} parent=0
    _
  %s8 = ssub.s32 1, %s6
  %s9 = scalar_select 0, %s8, %s6
  $region1: #{tpu_custom_call.1} parent=0
    #allocation2 [shape = 'u8[8192]{0}', space=vmem, size = 0x2000, scoped, tag = 'output window, operand 0, single buffered']
    #allocation3 [shape = 's32[1]{0}', space=sflag, size = 0x4, scoped, tag = 'scoped memory for tpu_custom_call.1']
    %10 = vsyncpa [#allocation3], 0
    // Predicated region
    $region2: #{tpu_custom_call.1} parent=1 // pred_check
      _
    $region3: #{tpu_custom_call.1} parent=1 // pred_check_branch
      %12 = sbr.rel (0) target = $region5
    $region4: #{tpu_custom_call.1} parent=1 // pred_region
      _
    $region5: #{tpu_custom_call.1} parent=1 // pred_fallthru
      _
    // Predicated region
    $region6: #{tpu_custom_call.1} parent=1 // pred_check
      _
    $region7: #{tpu_custom_call.1} parent=1 // pred_check_branch
      %14 = sbr.rel (0) target = $region9
    $region8: #{tpu_custom_call.1} parent=1 // pred_region
      _
    $region9: #{tpu_custom_call.1} parent=1 // pred_fallthru
      _
    // Predicated region
    $region10: #{tpu_custom_call.1} parent=1 // pred_check
      _
    $region11: #{tpu_custom_call.1} parent=1 // pred_check_branch
      %16 = sbr.rel (0) target = $region13
    $region12: #{tpu_custom_call.1} parent=1 // pred_region
      _
    $region13: #{tpu_custom_call.1} parent=1 // pred_fallthru
      _
    // Predicated region
    $region14: #{tpu_custom_call.1} parent=1 // pred_check
      _
    $region15: #{tpu_custom_call.1} parent=1 // pred_check_branch
      %18 = sbr.rel (0) target = $region17
    $region16: #{tpu_custom_call.1} parent=1 // pred_region
      _
    $region17: #{tpu_custom_call.1} parent=1 // pred_fallthru
      _
    // Predicated region
    $region18: #{tpu_custom_call.1} parent=1 // pred_check
      _
    $region19: #{tpu_custom_call.1} parent=1 // pred_check_branch
      %20 = sbr.rel (0) target = $region21
    $region20: #{tpu_custom_call.1} parent=1 // pred_region
      _
    $region21: #{tpu_custom_call.1} parent=1 // pred_fallthru
      _
    %v22 = vld [vmem:[%s3] sm:$0xf]
    %v23 = vld [vmem:[%s3 + $0x4] sm:$0xf]
    %v24 = vunpack.c.l.bf16 %v22
    %v25 = vunpack.c.l.bf16 %v23
    %vm26 = vcmp.gt.f32.partialorder %v24, 0.0
    %vm27 = vcmp.gt.f32.partialorder %v25, 0.0
    %v28 = vld [vmem:[%s1] sm:$0xff]
    %v29 = vld [vmem:[%s1 + $0x8] sm:$0xff]
    %v30 = vld [vmem:[%s2] sm:$0x3]
    %v31 = vld [vmem:[%s0] sm:$0xf]
    %v32 = vld [vmem:[%s0 + $0x4] sm:$0xf]
    %34 = vset.pattern.permute.xlu0 0
    %35 = vperm.xlu0 %34, %v28
    %v36 = vpop.permute.xlu0 %35
    %39 = vset.pattern.permute.xlu0 0
    %40 = vperm.xlu0 %39, %v29
    %v41 = vpop.permute.xlu0 %40
    %v43 = vlaneseq
    %v44 = vshrl.u32 %v43, 7
    %v45 = vsub.s32 0, %v44
    %v46 = vrot.slane %v30, %v45
    %v47 = vadd.f32 %v36, %v46
    %v48 = vadd.f32 %v41, %v46
    %vm49 = vcmp.gt.f32.partialorder %v47, 0.0
    %vm50 = vcmp.gt.f32.partialorder %v48, 0.0
    %v51 = vmul.f32 %v47, 0.2
    %v52 = vmul.f32 %v48, 0.2
    %v53 = vsel %vm49, %v47, %v51
    %v54 = vsel %vm50, %v48, %v52
    %v55 = vsel %vm26, %v53, -1e+30
    %v56 = vsel %vm27, %v54, -1e+30
    %vm57 = vcmask 130048
    %v58 = vsel %vm57, %v55, -inf
    %v59 = vsel %vm57, %v56, -inf
    %v60 = vmax.f32 %v58, %v59
    %v61 = vrot.slane %v60, 4
    %v62 = vmax.f32 %v60, %v61
    %v63 = vrot.slane %v62, 2
    %v64 = vmax.f32 %v62, %v63
    %v65 = vrot.slane %v64, 1
    %v66 = vmax.f32 %v64, %v65
    %v67 = vsub.f32 %v55, %v66
    %v68 = vsub.f32 %v56, %v66
    %v69 = vmul.f32 %v67, 1.442695
    %v70 = vpow.pop %v69
    %v71 = vmul.f32 %v68, 1.442695
    %v72 = vpow.pop %v71
    %v73 = vsel %vm57, %v70, 0.0
    %v74 = vsel %vm57, %v72, 0.0
    %v75 = vadd.f32 %v73, %v74
    %v76 = vrot.slane %v75, 4
    %v77 = vadd.f32 %v75, %v76
    %v78 = vrot.slane %v77, 2
    %v79 = vadd.f32 %v77, %v78
    %v80 = vrot.slane %v79, 1
    %v81 = vadd.f32 %v79, %v80
    %v82 = vrcp.pop %v81
    %v83 = vmul.f32 %v70, %v82
    %v84 = vmul.f32 %v72, %v82
    %v85 = vmul.f32 %v83, %v24
    %v86 = vmul.f32 %v84, %v25
    %v87 = vpack.c.bf16 %v86, %v85
    %v89 = vsel %vm57, %v31, 0
    %91 = vmatprep.subr.bf16.mxu0 0
    %92 = vmatpush1.bf16.msra.mxu0 %v87
    %93 = vmatprep.subr.bf16.mxu0 0
    %94 = vmatpush1.bf16.msra.mxu0 0
    %95 = vmatprep.subr.bf16.mxu0 0
    %96 = vmatpush1.bf16.msra.mxu0 0
    %97 = vmatprep.subr.bf16.mxu0 0
    %98 = vmatpush1.bf16.msra.mxu0 0
    %99 = vmatprep.subr.bf16.mxu0 0
    %100 = vmatpush1.bf16.msra.mxu0 0
    %101 = vmatprep.subr.bf16.mxu0 0
    %102 = vmatpush1.bf16.msra.mxu0 0
    %103 = vmatprep.subr.bf16.mxu0 0
    %104 = vmatpush1.bf16.msra.mxu0 0
    %105 = vmatprep.subr.bf16.mxu0 0
    %106 = vmatpush1.bf16.msra.mxu0 0
    %107 = vmatprep.subr.bf16.mxu0 0
    %108 = vmatpush1.bf16.msra.mxu0 0
    %109 = vmatprep.subr.bf16.mxu0 0
    %110 = vmatpush1.bf16.msra.mxu0 0
    %111 = vmatprep.subr.bf16.mxu0 0
    %112 = vmatpush1.bf16.msra.mxu0 0
    %113 = vmatprep.subr.bf16.mxu0 0
    %114 = vmatpush1.bf16.msra.mxu0 0
    %115 = vmatprep.subr.bf16.mxu0 0
    %116 = vmatpush1.bf16.msra.mxu0 0
    %117 = vmatprep.subr.bf16.mxu0 0
    %118 = vmatpush1.bf16.msra.mxu0 0
    %119 = vmatprep.subr.bf16.mxu0 0
    %120 = vmatpush1.bf16.msra.mxu0 0
    %121 = vmatprep.subr.bf16.mxu0 0
    %122 = vmatpush1.bf16.msra.mxu0 0
    %123 = vmatprep.mubr.bf16.mxu0 0
    %124 = vmatmul.mubr.bf16.gmra.mrb[0].mxu0 %v89
    %v125 = vpop.f32.mrb[0].mxu0
    %v126 = vadd.f32 0.0, %v125
    %v127 = vpop.f32.mrb[0].mxu0
    %v128 = vpop.f32.mrb[0].mxu0
    %v129 = vpop.f32.mrb[0].mxu0
    %130 = vdwg.mxu0
    %131 = vset.pattern.permute.xlu0 1
    %132 = vperm.xlu0 %131, %v28
    %v133 = vpop.permute.xlu0 %132
    %135 = vset.pattern.permute.xlu0 1
    %136 = vperm.xlu0 %135, %v29
    %v137 = vpop.permute.xlu0 %136
    %v139 = vlaneseq
    %v140 = vshrl.u32 %v139, 7
    %v141 = vsub.s32 1, %v140
    %v142 = vrot.slane %v30, %v141
    %v143 = vadd.f32 %v133, %v142
    %v144 = vadd.f32 %v137, %v142
    %vm145 = vcmp.gt.f32.partialorder %v143, 0.0
    %vm146 = vcmp.gt.f32.partialorder %v144, 0.0
    %v147 = vmul.f32 %v143, 0.2
    %v148 = vmul.f32 %v144, 0.2
    %v149 = vsel %vm145, %v143, %v147
    %v150 = vsel %vm146, %v144, %v148
    %v151 = vsel %vm26, %v149, -1e+30
    %v152 = vsel %vm27, %v150, -1e+30
    %v153 = vsel %vm57, %v151, -inf
    %v154 = vsel %vm57, %v152, -inf
    %v155 = vmax.f32 %v153, %v154
    %v156 = vrot.slane %v155, 4
    %v157 = vmax.f32 %v155, %v156
    %v158 = vrot.slane %v157, 2
    %v159 = vmax.f32 %v157, %v158
    %v160 = vrot.slane %v159, 1
    %v161 = vmax.f32 %v159, %v160
    %v162 = vsub.f32 %v151, %v161
    %v163 = vsub.f32 %v152, %v161
    %v164 = vmul.f32 %v162, 1.442695
    %v165 = vpow.pop %v164
    %v166 = vmul.f32 %v163, 1.442695
    %v167 = vpow.pop %v166
    %v168 = vsel %vm57, %v165, 0.0
    %v169 = vsel %vm57, %v167, 0.0
    %v170 = vadd.f32 %v168, %v169
    %v171 = vrot.slane %v170, 4
    %v172 = vadd.f32 %v170, %v171
    %v173 = vrot.slane %v172, 2
    %v174 = vadd.f32 %v172, %v173
    %v175 = vrot.slane %v174, 1
    %v176 = vadd.f32 %v174, %v175
    %v177 = vrcp.pop %v176
    %v178 = vmul.f32 %v165, %v177
    %v179 = vmul.f32 %v167, %v177
    %v180 = vmul.f32 %v178, %v24
    %v181 = vmul.f32 %v179, %v25
    %v182 = vpack.c.bf16 %v181, %v180
    %v184 = vsel %vm57, %v32, 0
    %186 = vmatprep.subr.bf16.mxu0 0
    %187 = vmatpush1.bf16.msra.mxu0 %v182
    %188 = vmatprep.subr.bf16.mxu0 0
    %189 = vmatpush1.bf16.msra.mxu0 0
    %190 = vmatprep.subr.bf16.mxu0 0
    %191 = vmatpush1.bf16.msra.mxu0 0
    %192 = vmatprep.subr.bf16.mxu0 0
    %193 = vmatpush1.bf16.msra.mxu0 0
    %194 = vmatprep.subr.bf16.mxu0 0
    %195 = vmatpush1.bf16.msra.mxu0 0
    %196 = vmatprep.subr.bf16.mxu0 0
    %197 = vmatpush1.bf16.msra.mxu0 0
    %198 = vmatprep.subr.bf16.mxu0 0
    %199 = vmatpush1.bf16.msra.mxu0 0
    %200 = vmatprep.subr.bf16.mxu0 0
    %201 = vmatpush1.bf16.msra.mxu0 0
    %202 = vmatprep.subr.bf16.mxu0 0
    %203 = vmatpush1.bf16.msra.mxu0 0
    %204 = vmatprep.subr.bf16.mxu0 0
    %205 = vmatpush1.bf16.msra.mxu0 0
    %206 = vmatprep.subr.bf16.mxu0 0
    %207 = vmatpush1.bf16.msra.mxu0 0
    %208 = vmatprep.subr.bf16.mxu0 0
    %209 = vmatpush1.bf16.msra.mxu0 0
    %210 = vmatprep.subr.bf16.mxu0 0
    %211 = vmatpush1.bf16.msra.mxu0 0
    %212 = vmatprep.subr.bf16.mxu0 0
    %213 = vmatpush1.bf16.msra.mxu0 0
    %214 = vmatprep.subr.bf16.mxu0 0
    %215 = vmatpush1.bf16.msra.mxu0 0
    %216 = vmatprep.subr.bf16.mxu0 0
    %217 = vmatpush1.bf16.msra.mxu0 0
    %218 = vmatprep.mubr.bf16.mxu0 0
    %219 = vmatmul.mubr.bf16.gmra.mrb[0].mxu0 %v184
    %v220 = vpop.f32.mrb[0].mxu0
    %v221 = vadd.f32 0.0, %v220
    %v222 = vpop.f32.mrb[0].mxu0
    %v223 = vpop.f32.mrb[0].mxu0
    %v224 = vpop.f32.mrb[0].mxu0
    %225 = vdwg.mxu0
    %v226 = vld [vmem:[%s4] sm:$0xff]
    %v227 = vld [vmem:[%s4 + $0x8] sm:$0xff]
    %229 = vset.pattern.permute.xlu0 0
    %230 = vperm.xlu0 %229, %v226
    %v231 = vpop.permute.xlu0 %230
    %234 = vset.pattern.permute.xlu0 0
    %235 = vperm.xlu0 %234, %v227
    %v236 = vpop.permute.xlu0 %235
    %v238 = vadd.f32 %v126, %v231
    %v239 = vadd.f32 %v221, %v236
    %240 = vst.msk [vmem:[#allocation2] sm:$0xff] %vm57, %v238
    %241 = vst.msk [vmem:[#allocation2 + $0x8] sm:$0xff] %vm57, %v239
    // Predicated region
    $region22: #{tpu_custom_call.1} parent=1 // pred_check
      _
    $region23: #{tpu_custom_call.1} parent=1 // pred_check_branch
      %243 = sbr.rel (0) target = $region25
    $region24: #{tpu_custom_call.1} parent=1 // pred_region
      %s245 = ssub.s32 256, 256
      %246 = vsyncadd [#allocation3], %s245
      %s247 = sshll.u32 [#allocation2], 4
      %s248 = int_to_ptr.vmem [resolvable:$true] %s247
      %253 = dma.vmem_to_hbm [thread:$0]  %s248, 256, %s5, [#allocation3], 128, 128, 8
    $region25: #{tpu_custom_call.1} parent=1 // pred_fallthru
      _
    // Predicated region
    $region26: #{tpu_custom_call.1} parent=1 // pred_check
      _
    $region27: #{tpu_custom_call.1} parent=1 // pred_check_branch
      %255 = sbr.rel (0) target = $region29
    $region28: #{tpu_custom_call.1} parent=1 // pred_region
      %256 = dma.done [#allocation3], 256
    $region29: #{tpu_custom_call.1} parent=1 // pred_fallthru
      _
    %257 = vsyncpa [#allocation3], 1

</llo_original>
